<compile_context>
chip_gen: v7x
topology: tpu7x:2x2x1
jax: 0.10.0
libtpu: 0.0.40
codegen_flags: <defaults>
</compile_context>

<pallas_src>
import jax
import jax.numpy as jnp
from jax.experimental import pallas as pl
from jax.experimental.pallas import tpu as pltpu


def _dynconv_kernel(x_ref, a_ref, o_ref):
    # x_ref: (1, C, V, TL)   a_ref: (1, V, W, TL)   o_ref: (1, C, W, TL)
    x = x_ref[0]                     # (C, V, TL), input dtype
    a = a_ref[0]                     # (V, W, TL), input dtype
    C, V, TL = x.shape
    W = a.shape[1]

    acc = jnp.zeros((C, W, TL), dtype=jnp.float32)
    # V is a static (trace-time) int; this unrolls into V broadcast-FMA steps on
    # the VPU, each lane-dense over TL.  Per-slice upcasts keep the f32 working
    # set small (no full f32 copies of x / a when inputs are bf16).
    # TODO(synk): for very large node counts V, switch to a chunked fori_loop /
    # W-tiled variant to bound trace size; static unroll is fine for typical
    # MTGNN graph sizes.
    for v in range(V):
        xv = x[:, v:v + 1, :].astype(jnp.float32)   # (C, 1, TL)
        av = a[v:v + 1].astype(jnp.float32)         # (1, W, TL)
        acc = acc + xv * av                         # -> (C, W, TL)

    o_ref[0] = acc.astype(o_ref.dtype)


def _pick_time_tile(L, C, V, W, itemsize, vmem_budget_bytes):
    """Largest multiple-of-128 time tile that divides L and fits the VMEM budget."""
    # Per lane of TL: double-buffered x / adj / out blocks plus the f32
    # accumulator (and small per-step f32 slices).
    bytes_per_l = 2 * (C * V + V * W + C * W) * itemsize + (C * W + C + W) * 4
    max_tl = max(1, vmem_budget_bytes // bytes_per_l)
    tl = (min(L, max_tl) // 128) * 128
    while tl >= 128:
        if L % tl == 0:
            return tl
        tl -= 128
    # Fall back to the full last dim (always a legal block shape).
    return L


def dynconv_forward(x, adj, *, vmem_budget_bytes=12 * 1024 * 1024):
    """x: (N, C, V, L); adj: (N, V, W, L) -> out: (N, C, W, L)."""
    N, C, V, L = x.shape
    Na, Va, W, La = adj.shape
    assert (N, V, L) == (Na, Va, La), (x.shape, adj.shape)

    tl = _pick_time_tile(L, C, V, W, jnp.dtype(x.dtype).itemsize, vmem_budget_bytes)
    grid = (N, L // tl)

    out = pl.pallas_call(
        _dynconv_kernel,
        out_shape=jax.ShapeDtypeStruct((N, C, W, L), x.dtype),
        grid=grid,
        in_specs=[
            pl.BlockSpec((1, C, V, tl), lambda n, l: (n, 0, 0, l)),   # x slab
            pl.BlockSpec((1, V, W, tl), lambda n, l: (n, 0, 0, l)),   # adj slab
        ],
        out_specs=pl.BlockSpec((1, C, W, tl), lambda n, l: (n, 0, 0, l)),
        compiler_params=pltpu.CompilerParams(
            dimension_semantics=("parallel", "parallel"),
            vmem_limit_bytes=32 * 1024 * 1024,
        ),
    )(x, adj)
    # .contiguous() in the PyTorch module is a layout no-op here.
    return out


if __name__ == "__main__":
    # Small shapes consistent with the module: batch N, channels C, nodes V/W, seq L.
    # L = 128 keeps the lane dim dense (one full vreg lane width) while staying small.
    N, C, V, W, L = 2, 4, 16, 16, 128

    key = jax.random.PRNGKey(0)
    kx, ka = jax.random.split(key)
    x = jax.random.normal(kx, (N, C, V, L), dtype=jnp.float32)
    adj = jax.random.normal(ka, (N, V, W, L), dtype=jnp.float32)

    out = dynconv_forward(x, adj)
    out = jax.block_until_ready(out)

    ref = jnp.einsum('ncvl,nvwl->ncwl', x, adj)
    assert out.shape == (N, C, W, L), out.shape
    assert jnp.allclose(out, ref, rtol=1e-5, atol=1e-5), float(jnp.max(jnp.abs(out - ref)))

    print("KERNEL_OK")
</pallas_src>

<mosaic_0001>
module attributes {stable_mosaic.version = 11 : i64} {
  func.func @_dynconv_kernel(%arg0: i32, %arg1: i32, %arg2: memref<1x4x16x128xf32, #tpu.memory_space<vmem>>, %arg3: memref<1x16x16x128xf32, #tpu.memory_space<vmem>>, %arg4: memref<1x4x16x128xf32, #tpu.memory_space<vmem>>) attributes {dimension_semantics = [#tpu.dimension_semantics<parallel>, #tpu.dimension_semantics<parallel>], iteration_bounds = array<i64: 2, 1>, scalar_prefetch = 0 : i64, scratch_operands = 0 : i64, tpu.core_type = #tpu.core_type<tc>, window_params = [{transform_indices = @transform_0, window_bounds = array<i64: 1, 4, 16, 128>}, {transform_indices = @transform_1, window_bounds = array<i64: 1, 16, 16, 128>}, {transform_indices = @transform_2, window_bounds = array<i64: 1, 4, 16, 128>}]} {
    %c0 = arith.constant 0 : index
    %c0_0 = arith.constant 0 : index
    %c0_1 = arith.constant 0 : index
    %c0_2 = arith.constant 0 : index
    %0 = vector.load %arg2[%c0, %c0_0, %c0_1, %c0_2] : memref<1x4x16x128xf32, #tpu.memory_space<vmem>>, vector<1x4x16x128xf32>
    %1 = vector.shape_cast %0 : vector<1x4x16x128xf32> to vector<4x16x128xf32>
    %c0_3 = arith.constant 0 : index
    %c0_4 = arith.constant 0 : index
    %c0_5 = arith.constant 0 : index
    %c0_6 = arith.constant 0 : index
    %2 = vector.load %arg3[%c0_3, %c0_4, %c0_5, %c0_6] : memref<1x16x16x128xf32, #tpu.memory_space<vmem>>, vector<1x16x16x128xf32>
    %3 = vector.shape_cast %2 : vector<1x16x16x128xf32> to vector<16x16x128xf32>
    %cst = arith.constant 0.000000e+00 : f32
    %4 = vector.broadcast %cst : f32 to vector<4x16x128xf32>
    %5 = vector.extract_strided_slice %1 {offsets = [0, 0, 0], sizes = [4, 1, 128], strides = [1, 1, 1]} : vector<4x16x128xf32> to vector<4x1x128xf32>
    %6 = vector.extract_strided_slice %3 {offsets = [0, 0, 0], sizes = [1, 16, 128], strides = [1, 1, 1]} : vector<16x16x128xf32> to vector<1x16x128xf32>
    %7 = vector.broadcast %5 : vector<4x1x128xf32> to vector<4x16x128xf32>
    %8 = vector.broadcast %6 : vector<1x16x128xf32> to vector<4x16x128xf32>
    %9 = arith.mulf %7, %8 : vector<4x16x128xf32>
    %10 = arith.addf %4, %9 : vector<4x16x128xf32>
    %11 = vector.extract_strided_slice %1 {offsets = [0, 1, 0], sizes = [4, 1, 128], strides = [1, 1, 1]} : vector<4x16x128xf32> to vector<4x1x128xf32>
    %12 = vector.extract_strided_slice %3 {offsets = [1, 0, 0], sizes = [1, 16, 128], strides = [1, 1, 1]} : vector<16x16x128xf32> to vector<1x16x128xf32>
    %13 = vector.broadcast %11 : vector<4x1x128xf32> to vector<4x16x128xf32>
    %14 = vector.broadcast %12 : vector<1x16x128xf32> to vector<4x16x128xf32>
    %15 = arith.mulf %13, %14 : vector<4x16x128xf32>
    %16 = arith.addf %10, %15 : vector<4x16x128xf32>
    %17 = vector.extract_strided_slice %1 {offsets = [0, 2, 0], sizes = [4, 1, 128], strides = [1, 1, 1]} : vector<4x16x128xf32> to vector<4x1x128xf32>
    %18 = vector.extract_strided_slice %3 {offsets = [2, 0, 0], sizes = [1, 16, 128], strides = [1, 1, 1]} : vector<16x16x128xf32> to vector<1x16x128xf32>
    %19 = vector.broadcast %17 : vector<4x1x128xf32> to vector<4x16x128xf32>
    %20 = vector.broadcast %18 : vector<1x16x128xf32> to vector<4x16x128xf32>
    %21 = arith.mulf %19, %20 : vector<4x16x128xf32>
    %22 = arith.addf %16, %21 : vector<4x16x128xf32>
    %23 = vector.extract_strided_slice %1 {offsets = [0, 3, 0], sizes = [4, 1, 128], strides = [1, 1, 1]} : vector<4x16x128xf32> to vector<4x1x128xf32>
    %24 = vector.extract_strided_slice %3 {offsets = [3, 0, 0], sizes = [1, 16, 128], strides = [1, 1, 1]} : vector<16x16x128xf32> to vector<1x16x128xf32>
    %25 = vector.broadcast %23 : vector<4x1x128xf32> to vector<4x16x128xf32>
    %26 = vector.broadcast %24 : vector<1x16x128xf32> to vector<4x16x128xf32>
    %27 = arith.mulf %25, %26 : vector<4x16x128xf32>
    %28 = arith.addf %22, %27 : vector<4x16x128xf32>
    %29 = vector.extract_strided_slice %1 {offsets = [0, 4, 0], sizes = [4, 1, 128], strides = [1, 1, 1]} : vector<4x16x128xf32> to vector<4x1x128xf32>
    %30 = vector.extract_strided_slice %3 {offsets = [4, 0, 0], sizes = [1, 16, 128], strides = [1, 1, 1]} : vector<16x16x128xf32> to vector<1x16x128xf32>
    %31 = vector.broadcast %29 : vector<4x1x128xf32> to vector<4x16x128xf32>
    %32 = vector.broadcast %30 : vector<1x16x128xf32> to vector<4x16x128xf32>
    %33 = arith.mulf %31, %32 : vector<4x16x128xf32>
    %34 = arith.addf %28, %33 : vector<4x16x128xf32>
    %35 = vector.extract_strided_slice %1 {offsets = [0, 5, 0], sizes = [4, 1, 128], strides = [1, 1, 1]} : vector<4x16x128xf32> to vector<4x1x128xf32>
    %36 = vector.extract_strided_slice %3 {offsets = [5, 0, 0], sizes = [1, 16, 128], strides = [1, 1, 1]} : vector<16x16x128xf32> to vector<1x16x128xf32>
    %37 = vector.broadcast %35 : vector<4x1x128xf32> to vector<4x16x128xf32>
    %38 = vector.broadcast %36 : vector<1x16x128xf32> to vector<4x16x128xf32>
    %39 = arith.mulf %37, %38 : vector<4x16x128xf32>
    %40 = arith.addf %34, %39 : vector<4x16x128xf32>
    %41 = vector.extract_strided_slice %1 {offsets = [0, 6, 0], sizes = [4, 1, 128], strides = [1, 1, 1]} : vector<4x16x128xf32> to vector<4x1x128xf32>
    %42 = vector.extract_strided_slice %3 {offsets = [6, 0, 0], sizes = [1, 16, 128], strides = [1, 1, 1]} : vector<16x16x128xf32> to vector<1x16x128xf32>
    %43 = vector.broadcast %41 : vector<4x1x128xf32> to vector<4x16x128xf32>
    %44 = vector.broadcast %42 : vector<1x16x128xf32> to vector<4x16x128xf32>
    %45 = arith.mulf %43, %44 : vector<4x16x128xf32>
    %46 = arith.addf %40, %45 : vector<4x16x128xf32>
    %47 = vector.extract_strided_slice %1 {offsets = [0, 7, 0], sizes = [4, 1, 128], strides = [1, 1, 1]} : vector<4x16x128xf32> to vector<4x1x128xf32>
    %48 = vector.extract_strided_slice %3 {offsets = [7, 0, 0], sizes = [1, 16, 128], strides = [1, 1, 1]} : vector<16x16x128xf32> to vector<1x16x128xf32>
    %49 = vector.broadcast %47 : vector<4x1x128xf32> to vector<4x16x128xf32>
    %50 = vector.broadcast %48 : vector<1x16x128xf32> to vector<4x16x128xf32>
    %51 = arith.mulf %49, %50 : vector<4x16x128xf32>
    %52 = arith.addf %46, %51 : vector<4x16x128xf32>
    %53 = vector.extract_strided_slice %1 {offsets = [0, 8, 0], sizes = [4, 1, 128], strides = [1, 1, 1]} : vector<4x16x128xf32> to vector<4x1x128xf32>
    %54 = vector.extract_strided_slice %3 {offsets = [8, 0, 0], sizes = [1, 16, 128], strides = [1, 1, 1]} : vector<16x16x128xf32> to vector<1x16x128xf32>
    %55 = vector.broadcast %53 : vector<4x1x128xf32> to vector<4x16x128xf32>
    %56 = vector.broadcast %54 : vector<1x16x128xf32> to vector<4x16x128xf32>
    %57 = arith.mulf %55, %56 : vector<4x16x128xf32>
    %58 = arith.addf %52, %57 : vector<4x16x128xf32>
    %59 = vector.extract_strided_slice %1 {offsets = [0, 9, 0], sizes = [4, 1, 128], strides = [1, 1, 1]} : vector<4x16x128xf32> to vector<4x1x128xf32>
    %60 = vector.extract_strided_slice %3 {offsets = [9, 0, 0], sizes = [1, 16, 128], strides = [1, 1, 1]} : vector<16x16x128xf32> to vector<1x16x128xf32>
    %61 = vector.broadcast %59 : vector<4x1x128xf32> to vector<4x16x128xf32>
    %62 = vector.broadcast %60 : vector<1x16x128xf32> to vector<4x16x128xf32>
    %63 = arith.mulf %61, %62 : vector<4x16x128xf32>
    %64 = arith.addf %58, %63 : vector<4x16x128xf32>
    %65 = vector.extract_strided_slice %1 {offsets = [0, 10, 0], sizes = [4, 1, 128], strides = [1, 1, 1]} : vector<4x16x128xf32> to vector<4x1x128xf32>
    %66 = vector.extract_strided_slice %3 {offsets = [10, 0, 0], sizes = [1, 16, 128], strides = [1, 1, 1]} : vector<16x16x128xf32> to vector<1x16x128xf32>
    %67 = vector.broadcast %65 : vector<4x1x128xf32> to vector<4x16x128xf32>
    %68 = vector.broadcast %66 : vector<1x16x128xf32> to vector<4x16x128xf32>
    %69 = arith.mulf %67, %68 : vector<4x16x128xf32>
    %70 = arith.addf %64, %69 : vector<4x16x128xf32>
    %71 = vector.extract_strided_slice %1 {offsets = [0, 11, 0], sizes = [4, 1, 128], strides = [1, 1, 1]} : vector<4x16x128xf32> to vector<4x1x128xf32>
    %72 = vector.extract_strided_slice %3 {offsets = [11, 0, 0], sizes = [1, 16, 128], strides = [1, 1, 1]} : vector<16x16x128xf32> to vector<1x16x128xf32>
    %73 = vector.broadcast %71 : vector<4x1x128xf32> to vector<4x16x128xf32>
    %74 = vector.broadcast %72 : vector<1x16x128xf32> to vector<4x16x128xf32>
    %75 = arith.mulf %73, %74 : vector<4x16x128xf32>
    %76 = arith.addf %70, %75 : vector<4x16x128xf32>
    %77 = vector.extract_strided_slice %1 {offsets = [0, 12, 0], sizes = [4, 1, 128], strides = [1, 1, 1]} : vector<4x16x128xf32> to vector<4x1x128xf32>
    %78 = vector.extract_strided_slice %3 {offsets = [12, 0, 0], sizes = [1, 16, 128], strides = [1, 1, 1]} : vector<16x16x128xf32> to vector<1x16x128xf32>
    %79 = vector.broadcast %77 : vector<4x1x128xf32> to vector<4x16x128xf32>
    %80 = vector.broadcast %78 : vector<1x16x128xf32> to vector<4x16x128xf32>
    %81 = arith.mulf %79, %80 : vector<4x16x128xf32>
    %82 = arith.addf %76, %81 : vector<4x16x128xf32>
    %83 = vector.extract_strided_slice %1 {offsets = [0, 13, 0], sizes = [4, 1, 128], strides = [1, 1, 1]} : vector<4x16x128xf32> to vector<4x1x128xf32>
    %84 = vector.extract_strided_slice %3 {offsets = [13, 0, 0], sizes = [1, 16, 128], strides = [1, 1, 1]} : vector<16x16x128xf32> to vector<1x16x128xf32>
    %85 = vector.broadcast %83 : vector<4x1x128xf32> to vector<4x16x128xf32>
    %86 = vector.broadcast %84 : vector<1x16x128xf32> to vector<4x16x128xf32>
    %87 = arith.mulf %85, %86 : vector<4x16x128xf32>
    %88 = arith.addf %82, %87 : vector<4x16x128xf32>
    %89 = vector.extract_strided_slice %1 {offsets = [0, 14, 0], sizes = [4, 1, 128], strides = [1, 1, 1]} : vector<4x16x128xf32> to vector<4x1x128xf32>
    %90 = vector.extract_strided_slice %3 {offsets = [14, 0, 0], sizes = [1, 16, 128], strides = [1, 1, 1]} : vector<16x16x128xf32> to vector<1x16x128xf32>
    %91 = vector.broadcast %89 : vector<4x1x128xf32> to vector<4x16x128xf32>
    %92 = vector.broadcast %90 : vector<1x16x128xf32> to vector<4x16x128xf32>
    %93 = arith.mulf %91, %92 : vector<4x16x128xf32>
    %94 = arith.addf %88, %93 : vector<4x16x128xf32>
    %95 = vector.extract_strided_slice %1 {offsets = [0, 15, 0], sizes = [4, 1, 128], strides = [1, 1, 1]} : vector<4x16x128xf32> to vector<4x1x128xf32>
    %96 = vector.extract_strided_slice %3 {offsets = [15, 0, 0], sizes = [1, 16, 128], strides = [1, 1, 1]} : vector<16x16x128xf32> to vector<1x16x128xf32>
    %97 = vector.broadcast %95 : vector<4x1x128xf32> to vector<4x16x128xf32>
    %98 = vector.broadcast %96 : vector<1x16x128xf32> to vector<4x16x128xf32>
    %99 = arith.mulf %97, %98 : vector<4x16x128xf32>
    %100 = arith.addf %94, %99 : vector<4x16x128xf32>
    %c0_7 = arith.constant 0 : index
    %c0_8 = arith.constant 0 : index
    %c0_9 = arith.constant 0 : index
    %c0_10 = arith.constant 0 : index
    %101 = vector.load %arg4[%c0_7, %c0_8, %c0_9, %c0_10] : memref<1x4x16x128xf32, #tpu.memory_space<vmem>>, vector<1x4x16x128xf32>
    %102 = vector.shape_cast %101 : vector<1x4x16x128xf32> to vector<4x16x128xf32>
    %103 = vector.shape_cast %100 : vector<4x16x128xf32> to vector<1x4x16x128xf32>
    tpu.vector_store %arg4[%c0_7, %c0_8, %c0_9, %c0_10], %103 {strides = array<i32>} : memref<1x4x16x128xf32, #tpu.memory_space<vmem>>, vector<1x4x16x128xf32>,
    return
  }
  func.func @transform_0(%arg0: i32, %arg1: i32) -> (i32, i32, i32, i32) {
    %c0_i32 = arith.constant 0 : i32
    %c0_i32_0 = arith.constant 0 : i32
    %c0_i32_1 = arith.constant 0 : i32
    return %arg0, %c0_i32, %c0_i32_0, %arg1 : i32, i32, i32, i32
  }
  func.func @transform_1(%arg0: i32, %arg1: i32) -> (i32, i32, i32, i32) {
    %c0_i32 = arith.constant 0 : i32
    %c0_i32_0 = arith.constant 0 : i32
    %c0_i32_1 = arith.constant 0 : i32
    return %arg0, %c0_i32, %c0_i32_0, %arg1 : i32, i32, i32, i32
  }
  func.func @transform_2(%arg0: i32, %arg1: i32) -> (i32, i32, i32, i32) {
    %c0_i32 = arith.constant 0 : i32
    %c0_i32_0 = arith.constant 0 : i32
    %c0_i32_1 = arith.constant 0 : i32
    return %arg0, %c0_i32, %c0_i32_0, %arg1 : i32, i32, i32, i32
  }
}

</mosaic_0001>

<llo_original>
// kernel: tpu_custom_call.1
$region0: #{tpu_custom_call.1}
  #allocation0 [shape = 'u32[]', space=smem, size = 0x4, offset = 0x4, fixed_abs, tag = 'smem constant byte address 0x4 - core index']
  #allocation1 [shape = 'u32[144,128]{1,0:T(1,128)}', space=vmem, size = 0x12000, scoped, tag = 'internal scratch']
  %s0 = inlined_call_operand.hbm [shape: f32[2,4,16,128], index: 0, kind: input, shape index: {}]
  %s1 = inlined_call_operand.hbm [shape: f32[2,16,16,128], index: 1, kind: input, shape index: {}]
  %s2 = inlined_call_operand.hbm [shape: f32[2,4,16,128], index: 2, kind: output, shape index: {}]
  %s3 = sld [smem:[#allocation0]]
  $region49: #{tpu_custom_call.1} parent=0
    _
  %s5 = ssub.s32 1, %s3
  %s6 = scalar_select 0, %s5, %s3
  $region1: #{tpu_custom_call.1} parent=0
    #allocation2 [shape = 'u8[65536]{0}', space=vmem, size = 0x10000, scoped, tag = 'input window, operand 0']
    #allocation3 [shape = 's32[2]{0}', space=sflag, size = 0x8, scoped, tag = 'scoped memory for tpu_custom_call.1']
    #allocation4 [shape = 's32[2]{0}', space=sflag, size = 0x8, scoped, tag = 'scoped memory for tpu_custom_call.1']
    #allocation5 [shape = 'u8[262144]{0}', space=vmem, size = 0x40000, scoped, tag = 'input window, operand 1']
    #allocation6 [shape = 's32[2]{0}', space=sflag, size = 0x8, scoped, tag = 'scoped memory for tpu_custom_call.1']
    #allocation7 [shape = 'u8[65536]{0}', space=vmem, size = 0x10000, scoped, tag = 'output window, operand 0']
    %7 = vsyncpa [#allocation3], 0
    %s8 = scalar_lea.sflag [#allocation3], 1
    %9 = vsyncpa %s8, 0
    %10 = vsyncpa [#allocation6], 0
    %s11 = scalar_lea.sflag [#allocation6], 1
    %12 = vsyncpa %s11, 0
    %13 = vsyncpa [#allocation4], 0
    %s14 = scalar_lea.sflag [#allocation4], 1
    %15 = vsyncpa %s14, 0
    loop: start=0, step=1, limit=4
    $region2: #{tpu_custom_call.1} parent=1 // loop_pre_header
      _
    $region3: #{tpu_custom_call.1} parent=1 // loop_header
      %s17 = sphi 0, %s21
      %p18 = scmp.ge.s32.totalorder %s17, 4
      %s24 = sphi 0, %s36
      %s25 = sphi 0, %s32
      %s26 = sphi 0, %s24
      %s27 = sphi 0, %s25
      %s28 = sphi 0, %s26
      %s29 = sphi 0, %s27
      %s41 = sphi 0, %s43
      %s44 = sphi 0, %s41
      %s45 = sphi 0, %s44
      %s61 = sphi 0, %s45
      %s69 = sphi 0, %s71
      %s72 = sphi 0, %s69
      %s73 = sphi 0, %s72
      %s89 = sphi 0, %s73
      %s97 = sphi 0, %s99
      %s100 = sphi 0, %s97
      %s101 = sphi 0, %s100
      %s117 = sphi 0, %s101
    $region4: #{tpu_custom_call.1} parent=1 // loop_header_branch
      %20 = sbr.rel (%p18) target = $region8
    $region5: #{tpu_custom_call.1} parent=1 // loop_body
      %s22 = ssub.s32 %s17, 1
      %s23 = ssub.s32 %s17, 2
      %s30 = sadd.s32 1, %s25
      %p31 = scmp.ge.s32.totalorder %s30, 1
      %s32 = scalar_select %p31, 0, %s30
      %s33 = sadd.s32 1, %s24
      %s34 = scalar_select %p31, %s33, %s24
      %p35 = scmp.ge.s32.totalorder %s34, 2
      %s36 = scalar_select %p35, 0, %s34
      %s37 = ssub.s32 %s24, %s36
      %s38 = ssub.s32 %s25, %s32
      %s39 = sor.u32 %s37, %s38
      %p40 = scmp.eq.s32.totalorder %s39, 0
      %s42 = sadd.s32 %s41, 1
      %s43 = scalar_select %p40, %s41, %s42
      %p46 = pneg %p40
      %p47 = scmp.eq.s32.totalorder %s17, 1
      %p48 = por %p46, %p47
      %p49 = scmp.ne.s32.totalorder %s41, %s44
      %p50 = scmp.eq.s32.totalorder %s17, 0
      %p51 = por %p49, %p50
      %p52 = scmp.ne.s32.totalorder %s41, %s44
      %p53 = scmp.eq.s32.totalorder %s22, 1
      %p54 = por %p52, %p53
      %p55 = scmp.ne.s32.totalorder %s44, %s45
      %p56 = scmp.eq.s32.totalorder %s22, 0
      %p57 = por %p55, %p56
      %p58 = scmp.ne.s32.totalorder %s44, %s45
      %p59 = scmp.eq.s32.totalorder %s23, 1
      %p60 = por %p58, %p59
      %p62 = scmp.ne.s32.totalorder %s45, %s61
      %p63 = scmp.eq.s32.totalorder %s23, 0
      %p64 = por %p62, %p63
      %s65 = ssub.s32 %s24, %s36
      %s66 = ssub.s32 %s25, %s32
      %s67 = sor.u32 %s65, %s66
      %p68 = scmp.eq.s32.totalorder %s67, 0
      %s70 = sadd.s32 %s69, 1
      %s71 = scalar_select %p68, %s69, %s70
      %p74 = pneg %p68
      %p75 = scmp.eq.s32.totalorder %s17, 1
      %p76 = por %p74, %p75
      %p77 = scmp.ne.s32.totalorder %s69, %s72
      %p78 = scmp.eq.s32.totalorder %s17, 0
      %p79 = por %p77, %p78
      %p80 = scmp.ne.s32.totalorder %s69, %s72
      %p81 = scmp.eq.s32.totalorder %s22, 1
      %p82 = por %p80, %p81
      %p83 = scmp.ne.s32.totalorder %s72, %s73
      %p84 = scmp.eq.s32.totalorder %s22, 0
      %p85 = por %p83, %p84
      %p86 = scmp.ne.s32.totalorder %s72, %s73
      %p87 = scmp.eq.s32.totalorder %s23, 1
      %p88 = por %p86, %p87
      %p90 = scmp.ne.s32.totalorder %s73, %s89
      %p91 = scmp.eq.s32.totalorder %s23, 0
      %p92 = por %p90, %p91
      %s93 = ssub.s32 %s24, %s36
      %s94 = ssub.s32 %s25, %s32
      %s95 = sor.u32 %s93, %s94
      %p96 = scmp.eq.s32.totalorder %s95, 0
      %s98 = sadd.s32 %s97, 1
      %s99 = scalar_select %p96, %s97, %s98
      %p102 = pneg %p96
      %p103 = scmp.eq.s32.totalorder %s17, 1
      %p104 = por %p102, %p103
      %p105 = scmp.ne.s32.totalorder %s97, %s100
      %p106 = scmp.eq.s32.totalorder %s17, 0
      %p107 = por %p105, %p106
      %p108 = scmp.ne.s32.totalorder %s97, %s100
      %p109 = scmp.eq.s32.totalorder %s22, 1
      %p110 = por %p108, %p109
      %p111 = scmp.ne.s32.totalorder %s100, %s101
      %p112 = scmp.eq.s32.totalorder %s22, 0
      %p113 = por %p111, %p112
      %p114 = scmp.ne.s32.totalorder %s100, %s101
      %p115 = scmp.eq.s32.totalorder %s23, 1
      %p116 = por %p114, %p115
      %p118 = scmp.ne.s32.totalorder %s101, %s117
      %p119 = scmp.eq.s32.totalorder %s23, 0
      %p120 = por %p118, %p119
      %p121 = scmp.le.s32.totalorder 1, %s17
      %p122 = scmp.lt.s32.totalorder %s17, 3
      %p123 = pnand %p121, %p122
      %p124 = pneg %p123
      // Predicated region
      $region9: #{tpu_custom_call.1} parent=5 // pred_check
        _
      $region10: #{tpu_custom_call.1} parent=5 // pred_check_branch
        %126 = sbr.rel (%p123) target = $region12
      $region11: #{tpu_custom_call.1} parent=5 // pred_region
        %s127 = ssub.s32 %s17, 1
      $region12: #{tpu_custom_call.1} parent=5 // pred_fallthru
        _
      %p128 = scmp.lt.s32.totalorder %s17, 2
      // Predicated region
      $region13: #{tpu_custom_call.1} parent=5 // pred_check
        %p129 = pneg %p128
      $region14: #{tpu_custom_call.1} parent=5 // pred_check_branch
        %131 = sbr.rel (%p129) target = $region16
      $region15: #{tpu_custom_call.1} parent=5 // pred_region
        // Predicated region
        $region17: #{tpu_custom_call.1} parent=15 // pred_check
          %p132 = pneg %p51
        $region18: #{tpu_custom_call.1} parent=15 // pred_check_branch
          %134 = sbr.rel (%p132) target = $region20
        $region19: #{tpu_custom_call.1} parent=15 // pred_region
          %s135 = sand.u32 %s41, 1
          %s136 = scalar_lea.sflag [#allocation3], %s135
          %s137 = sand.u32 %s41, 1
          %s138 = smul.addr %s137, 64
          %s139 = scalar_lea.vmem [#allocation2], %s138
          %s141 = ssub.s32 1024, 1024
          %142 = vsyncadd %s136, %s141
          %s143 = smul.addr %s24, 8
          %s144 = sadd.s32 %s25, %s143
          %s145 = smul.addr %s144, 128
          %s146 = scalar_lea.hbm %s0, %s145
          %s147 = sshll.u32 %s139, 4
          %s148 = int_to_ptr.vmem [resolvable:$true] %s147
          %153 = dma.hbm_to_vmem [thread:$0]  %s146, 1024, %s148, %s136, 128, 128, 8
        $region20: #{tpu_custom_call.1} parent=15 // pred_fallthru
          _
        // Predicated region
        $region21: #{tpu_custom_call.1} parent=15 // pred_check
          %p154 = pneg %p79
        $region22: #{tpu_custom_call.1} parent=15 // pred_check_branch
          %156 = sbr.rel (%p154) target = $region24
        $region23: #{tpu_custom_call.1} parent=15 // pred_region
          %s157 = sand.u32 %s69, 1
          %s158 = scalar_lea.sflag [#allocation6], %s157
          %s159 = sand.u32 %s69, 1
          %s160 = smul.addr %s159, 256
          %s161 = scalar_lea.vmem [#allocation5], %s160
          %s163 = ssub.s32 4096, 4096
          %164 = vsyncadd %s158, %s163
          %s165 = smul.addr %s24, 32
          %s166 = sadd.s32 %s25, %s165
          %s167 = smul.addr %s166, 128
          %s168 = scalar_lea.hbm %s1, %s167
          %s169 = sshll.u32 %s161, 4
          %s170 = int_to_ptr.vmem [resolvable:$true] %s169
          %175 = dma.hbm_to_vmem [thread:$0]  %s168, 4096, %s170, %s158, 128, 128, 8
        $region24: #{tpu_custom_call.1} parent=15 // pred_fallthru
          _
      $region16: #{tpu_custom_call.1} parent=5 // pred_fallthru
        _
      %p176 = scmp.le.s32.totalorder 1, %s17
      %p177 = scmp.lt.s32.totalorder %s17, 3
      %p178 = pnand %p176, %p177
      %p179 = pneg %p178
      // Predicated region
      $region25: #{tpu_custom_call.1} parent=5 // pred_check
        _
      $region26: #{tpu_custom_call.1} parent=5 // pred_check_branch
        %181 = sbr.rel (%p178) target = $region28
      $region27: #{tpu_custom_call.1} parent=5 // pred_region
        %s182 = ssub.s32 %s17, 1
        %s183 = sand.u32 %s44, 1
        %s184 = scalar_lea.sflag [#allocation3], %s183
        %s185 = sand.u32 %s44, 1
        %s186 = smul.addr %s185, 64
        %s187 = scalar_lea.vmem [#allocation2], %s186
        // Predicated region
        $region29: #{tpu_custom_call.1} parent=27 // pred_check
          %p188 = pneg %p57
        $region30: #{tpu_custom_call.1} parent=27 // pred_check_branch
          %190 = sbr.rel (%p188) target = $region32
        $region31: #{tpu_custom_call.1} parent=27 // pred_region
          %191 = dma.done %s184, 1024
        $region32: #{tpu_custom_call.1} parent=27 // pred_fallthru
          _
        %s192 = sand.u32 %s72, 1
        %s193 = scalar_lea.sflag [#allocation6], %s192
        %s194 = sand.u32 %s72, 1
        %s195 = smul.addr %s194, 256
        %s196 = scalar_lea.vmem [#allocation5], %s195
        // Predicated region
        $region33: #{tpu_custom_call.1} parent=27 // pred_check
          %p197 = pneg %p85
        $region34: #{tpu_custom_call.1} parent=27 // pred_check_branch
          %199 = sbr.rel (%p197) target = $region36
        $region35: #{tpu_custom_call.1} parent=27 // pred_region
          %200 = dma.done %s193, 4096
        $region36: #{tpu_custom_call.1} parent=27 // pred_fallthru
          _
        %s201 = sand.u32 %s44, 1
        %s202 = scalar_lea.sflag [#allocation3], %s201
        %s203 = sand.u32 %s44, 1
        %s204 = smul.addr %s203, 64
        %s205 = scalar_lea.vmem [#allocation2], %s204
        %p206 = pneg %p57
        %p207 = pneg %p54
        %s208 = sand.u32 %s72, 1
        %s209 = scalar_lea.sflag [#allocation6], %s208
        %s210 = sand.u32 %s72, 1
        %s211 = smul.addr %s210, 256
        %s212 = scalar_lea.vmem [#allocation5], %s211
        %p213 = pneg %p85
        %p214 = pneg %p82
        %p215 = pneg %p113
        %p216 = pneg %p110
        %s217 = sand.u32 %s100, 1
        %s218 = scalar_lea.sflag [#allocation4], %s217
        %s219 = sand.u32 %s100, 1
        %s220 = smul.addr %s219, 64
        %s221 = scalar_lea.vmem [#allocation7], %s220
        %v222 = vld [vmem:[%s187] sm:$0xff]
        %v223 = vld [vmem:[%s187 + $0x8] sm:$0xff]
        %v224 = vld [vmem:[%s187 + $0x10] sm:$0xff]
        %v225 = vld [vmem:[%s187 + $0x18] sm:$0xff]
        %v226 = vld [vmem:[%s187 + $0x20] sm:$0xff]
        %v227 = vld [vmem:[%s187 + $0x28] sm:$0xff]
        %v228 = vld [vmem:[%s187 + $0x30] sm:$0xff]
        %v229 = vld [vmem:[%s187 + $0x38] sm:$0xff]
        %v230 = vld [vmem:[%s196] sm:$0xff]
        %v231 = vld [vmem:[%s196 + $0x8] sm:$0xff]
        %v232 = vld [vmem:[%s196 + $0x10] sm:$0xff]
        %v233 = vld [vmem:[%s196 + $0x18] sm:$0xff]
        %v234 = vld [vmem:[%s196 + $0x20] sm:$0xff]
        %v235 = vld [vmem:[%s196 + $0x28] sm:$0xff]
        %v236 = vld [vmem:[%s196 + $0x30] sm:$0xff]
        %v237 = vld [vmem:[%s196 + $0x38] sm:$0xff]
        %v238 = vld [vmem:[%s196 + $0x40] sm:$0xff]
        %v239 = vld [vmem:[%s196 + $0x48] sm:$0xff]
        %v240 = vld [vmem:[%s196 + $0x50] sm:$0xff]
        %v241 = vld [vmem:[%s196 + $0x58] sm:$0xff]
        %v242 = vld [vmem:[%s196 + $0x60] sm:$0xff]
        %v243 = vld [vmem:[%s196 + $0x68] sm:$0xff]
        %v244 = vld [vmem:[%s196 + $0x70] sm:$0xff]
        %v245 = vld [vmem:[%s196 + $0x78] sm:$0xff]
        %v246 = vld [vmem:[%s196 + $0x80] sm:$0xff]
        %v247 = vld [vmem:[%s196 + $0x88] sm:$0xff]
        %v248 = vld [vmem:[%s196 + $0x90] sm:$0xff]
        %v249 = vld [vmem:[%s196 + $0x98] sm:$0xff]
        %v250 = vld [vmem:[%s196 + $0xa0] sm:$0xff]
        %v251 = vld [vmem:[%s196 + $0xa8] sm:$0xff]
        %v252 = vld [vmem:[%s196 + $0xb0] sm:$0xff]
        %v253 = vld [vmem:[%s196 + $0xb8] sm:$0xff]
        %v254 = vld [vmem:[%s196 + $0xc0] sm:$0xff]
        %v255 = vld [vmem:[%s196 + $0xc8] sm:$0xff]
        %v256 = vld [vmem:[%s196 + $0xd0] sm:$0xff]
        %v257 = vld [vmem:[%s196 + $0xd8] sm:$0xff]
        %v258 = vld [vmem:[%s196 + $0xe0] sm:$0xff]
        %v259 = vld [vmem:[%s196 + $0xe8] sm:$0xff]
        %v260 = vld [vmem:[%s196 + $0xf0] sm:$0xff]
        %v261 = vld [vmem:[%s196 + $0xf8] sm:$0xff]
        %v262 = vlaneseq
        %v263 = vshrl.u32 %v262, 7
        %v264 = vsub.s32 0, %v263
        %v265 = vrot.slane %v222, %v264
        %v266 = vlaneseq
        %v267 = vshrl.u32 %v266, 7
        %v268 = vsub.s32 0, %v267
        %v269 = vrot.slane %v224, %v268
        %v270 = vlaneseq
        %v271 = vshrl.u32 %v270, 7
        %v272 = vsub.s32 0, %v271
        %v273 = vrot.slane %v226, %v272
        %v274 = vlaneseq
        %v275 = vshrl.u32 %v274, 7
        %v276 = vsub.s32 0, %v275
        %v277 = vrot.slane %v228, %v276
        %v278 = vmul.f32 %v265, %v230
        %v279 = vmul.f32 %v265, %v231
        %v280 = vmul.f32 %v269, %v230
        %v281 = vmul.f32 %v269, %v231
        %v282 = vmul.f32 %v273, %v230
        %v283 = vmul.f32 %v273, %v231
        %v284 = vmul.f32 %v277, %v230
        %v285 = vmul.f32 %v277, %v231
        %v286 = vadd.f32 %v278, 0.0
        %v287 = vadd.f32 %v279, 0.0
        %v288 = vadd.f32 %v280, 0.0
        %v289 = vadd.f32 %v281, 0.0
        %v290 = vadd.f32 %v282, 0.0
        %v291 = vadd.f32 %v283, 0.0
        %v292 = vadd.f32 %v284, 0.0
        %v293 = vadd.f32 %v285, 0.0
        %v294 = vlaneseq
        %v295 = vshrl.u32 %v294, 7
        %v296 = vsub.s32 1, %v295
        %v297 = vrot.slane %v222, %v296
        %v298 = vlaneseq
        %v299 = vshrl.u32 %v298, 7
        %v300 = vsub.s32 1, %v299
        %v301 = vrot.slane %v224, %v300
        %v302 = vlaneseq
        %v303 = vshrl.u32 %v302, 7
        %v304 = vsub.s32 1, %v303
        %v305 = vrot.slane %v226, %v304
        %v306 = vlaneseq
        %v307 = vshrl.u32 %v306, 7
        %v308 = vsub.s32 1, %v307
        %v309 = vrot.slane %v228, %v308
        %v310 = vmul.f32 %v297, %v232
        %v311 = vmul.f32 %v297, %v233
        %v312 = vmul.f32 %v301, %v232
        %v313 = vmul.f32 %v301, %v233
        %v314 = vmul.f32 %v305, %v232
        %v315 = vmul.f32 %v305, %v233
        %v316 = vmul.f32 %v309, %v232
        %v317 = vmul.f32 %v309, %v233
        %v318 = vadd.f32 %v286, %v310
        %v319 = vadd.f32 %v287, %v311
        %v320 = vadd.f32 %v288, %v312
        %v321 = vadd.f32 %v289, %v313
        %v322 = vadd.f32 %v290, %v314
        %v323 = vadd.f32 %v291, %v315
        %v324 = vadd.f32 %v292, %v316
        %v325 = vadd.f32 %v293, %v317
        %v326 = vlaneseq
        %v327 = vshrl.u32 %v326, 7
        %v328 = vsub.s32 2, %v327
        %v329 = vrot.slane %v222, %v328
        %v330 = vlaneseq
        %v331 = vshrl.u32 %v330, 7
        %v332 = vsub.s32 2, %v331
        %v333 = vrot.slane %v224, %v332
        %v334 = vlaneseq
        %v335 = vshrl.u32 %v334, 7
        %v336 = vsub.s32 2, %v335
        %v337 = vrot.slane %v226, %v336
        %v338 = vlaneseq
        %v339 = vshrl.u32 %v338, 7
        %v340 = vsub.s32 2, %v339
        %v341 = vrot.slane %v228, %v340
        %v342 = vmul.f32 %v329, %v234
        %v343 = vmul.f32 %v329, %v235
        %v344 = vmul.f32 %v333, %v234
        %v345 = vmul.f32 %v333, %v235
        %v346 = vmul.f32 %v337, %v234
        %v347 = vmul.f32 %v337, %v235
        %v348 = vmul.f32 %v341, %v234
        %v349 = vmul.f32 %v341, %v235
        %v350 = vadd.f32 %v318, %v342
        %v351 = vadd.f32 %v319, %v343
        %v352 = vadd.f32 %v320, %v344
        %v353 = vadd.f32 %v321, %v345
        %v354 = vadd.f32 %v322, %v346
        %v355 = vadd.f32 %v323, %v347
        %v356 = vadd.f32 %v324, %v348
        %v357 = vadd.f32 %v325, %v349
        %v358 = vlaneseq
        %v359 = vshrl.u32 %v358, 7
        %v360 = vsub.s32 3, %v359
        %v361 = vrot.slane %v222, %v360
        %v362 = vlaneseq
        %v363 = vshrl.u32 %v362, 7
        %v364 = vsub.s32 3, %v363
        %v365 = vrot.slane %v224, %v364
        %v366 = vlaneseq
        %v367 = vshrl.u32 %v366, 7
        %v368 = vsub.s32 3, %v367
        %v369 = vrot.slane %v226, %v368
        %v370 = vlaneseq
        %v371 = vshrl.u32 %v370, 7
        %v372 = vsub.s32 3, %v371
        %v373 = vrot.slane %v228, %v372
        %v374 = vmul.f32 %v361, %v236
        %v375 = vmul.f32 %v361, %v237
        %v376 = vmul.f32 %v365, %v236
        %v377 = vmul.f32 %v365, %v237
        %v378 = vmul.f32 %v369, %v236
        %v379 = vmul.f32 %v369, %v237
        %v380 = vmul.f32 %v373, %v236
        %v381 = vmul.f32 %v373, %v237
        %v382 = vadd.f32 %v350, %v374
        %v383 = vadd.f32 %v351, %v375
        %v384 = vadd.f32 %v352, %v376
        %v385 = vadd.f32 %v353, %v377
        %v386 = vadd.f32 %v354, %v378
        %v387 = vadd.f32 %v355, %v379
        %v388 = vadd.f32 %v356, %v380
        %v389 = vadd.f32 %v357, %v381
        %v390 = vlaneseq
        %v391 = vshrl.u32 %v390, 7
        %v392 = vsub.s32 4, %v391
        %v393 = vrot.slane %v222, %v392
        %v394 = vlaneseq
        %v395 = vshrl.u32 %v394, 7
        %v396 = vsub.s32 4, %v395
        %v397 = vrot.slane %v224, %v396
        %v398 = vlaneseq
        %v399 = vshrl.u32 %v398, 7
        %v400 = vsub.s32 4, %v399
        %v401 = vrot.slane %v226, %v400
        %v402 = vlaneseq
        %v403 = vshrl.u32 %v402, 7
        %v404 = vsub.s32 4, %v403
        %v405 = vrot.slane %v228, %v404
        %v406 = vmul.f32 %v393, %v238
        %v407 = vmul.f32 %v393, %v239
        %v408 = vmul.f32 %v397, %v238
        %v409 = vmul.f32 %v397, %v239
        %v410 = vmul.f32 %v401, %v238
        %v411 = vmul.f32 %v401, %v239
        %v412 = vmul.f32 %v405, %v238
        %v413 = vmul.f32 %v405, %v239
        %v414 = vadd.f32 %v382, %v406
        %v415 = vadd.f32 %v383, %v407
        %v416 = vadd.f32 %v384, %v408
        %v417 = vadd.f32 %v385, %v409
        %v418 = vadd.f32 %v386, %v410
        %v419 = vadd.f32 %v387, %v411
        %v420 = vadd.f32 %v388, %v412
        %v421 = vadd.f32 %v389, %v413
        %v422 = vlaneseq
        %v423 = vshrl.u32 %v422, 7
        %v424 = vsub.s32 5, %v423
        %v425 = vrot.slane %v222, %v424
        %v426 = vlaneseq
        %v427 = vshrl.u32 %v426, 7
        %v428 = vsub.s32 5, %v427
        %v429 = vrot.slane %v224, %v428
        %v430 = vlaneseq
        %v431 = vshrl.u32 %v430, 7
        %v432 = vsub.s32 5, %v431
        %v433 = vrot.slane %v226, %v432
        %v434 = vlaneseq
        %v435 = vshrl.u32 %v434, 7
        %v436 = vsub.s32 5, %v435
        %v437 = vrot.slane %v228, %v436
        %v438 = vmul.f32 %v425, %v240
        %v439 = vmul.f32 %v425, %v241
        %v440 = vmul.f32 %v429, %v240
        %v441 = vmul.f32 %v429, %v241
        %v442 = vmul.f32 %v433, %v240
        %v443 = vmul.f32 %v433, %v241
        %v444 = vmul.f32 %v437, %v240
        %v445 = vmul.f32 %v437, %v241
        %v446 = vadd.f32 %v414, %v438
        %v447 = vadd.f32 %v415, %v439
        %v448 = vadd.f32 %v416, %v440
        %v449 = vadd.f32 %v417, %v441
        %v450 = vadd.f32 %v418, %v442
        %v451 = vadd.f32 %v419, %v443
        %v452 = vadd.f32 %v420, %v444
        %v453 = vadd.f32 %v421, %v445
        %v454 = vlaneseq
        %v455 = vshrl.u32 %v454, 7
        %v456 = vsub.s32 6, %v455
        %v457 = vrot.slane %v222, %v456
        %v458 = vlaneseq
        %v459 = vshrl.u32 %v458, 7
        %v460 = vsub.s32 6, %v459
        %v461 = vrot.slane %v224, %v460
        %v462 = vlaneseq
        %v463 = vshrl.u32 %v462, 7
        %v464 = vsub.s32 6, %v463
        %v465 = vrot.slane %v226, %v464
        %v466 = vlaneseq
        %v467 = vshrl.u32 %v466, 7
        %v468 = vsub.s32 6, %v467
        %v469 = vrot.slane %v228, %v468
        %v470 = vmul.f32 %v457, %v242
        %v471 = vmul.f32 %v457, %v243
        %v472 = vmul.f32 %v461, %v242
        %v473 = vmul.f32 %v461, %v243
        %v474 = vmul.f32 %v465, %v242
        %v475 = vmul.f32 %v465, %v243
        %v476 = vmul.f32 %v469, %v242
        %v477 = vmul.f32 %v469, %v243
        %v478 = vadd.f32 %v446, %v470
        %v479 = vadd.f32 %v447, %v471
        %v480 = vadd.f32 %v448, %v472
        %v481 = vadd.f32 %v449, %v473
        %v482 = vadd.f32 %v450, %v474
        %v483 = vadd.f32 %v451, %v475
        %v484 = vadd.f32 %v452, %v476
        %v485 = vadd.f32 %v453, %v477
        %v486 = vlaneseq
        %v487 = vshrl.u32 %v486, 7
        %v488 = vsub.s32 7, %v487
        %v489 = vrot.slane %v222, %v488
        %v490 = vlaneseq
        %v491 = vshrl.u32 %v490, 7
        %v492 = vsub.s32 7, %v491
        %v493 = vrot.slane %v224, %v492
        %v494 = vlaneseq
        %v495 = vshrl.u32 %v494, 7
        %v496 = vsub.s32 7, %v495
        %v497 = vrot.slane %v226, %v496
        %v498 = vlaneseq
        %v499 = vshrl.u32 %v498, 7
        %v500 = vsub.s32 7, %v499
        %v501 = vrot.slane %v228, %v500
        %v502 = vmul.f32 %v489, %v244
        %v503 = vmul.f32 %v489, %v245
        %v504 = vmul.f32 %v493, %v244
        %v505 = vmul.f32 %v493, %v245
        %v506 = vmul.f32 %v497, %v244
        %v507 = vmul.f32 %v497, %v245
        %v508 = vmul.f32 %v501, %v244
        %v509 = vmul.f32 %v501, %v245
        %v510 = vadd.f32 %v478, %v502
        %v511 = vadd.f32 %v479, %v503
        %v512 = vadd.f32 %v480, %v504
        %v513 = vadd.f32 %v481, %v505
        %v514 = vadd.f32 %v482, %v506
        %v515 = vadd.f32 %v483, %v507
        %v516 = vadd.f32 %v484, %v508
        %v517 = vadd.f32 %v485, %v509
        %v518 = vlaneseq
        %v519 = vshrl.u32 %v518, 7
        %v520 = vsub.s32 0, %v519
        %v521 = vrot.slane %v223, %v520
        %v522 = vlaneseq
        %v523 = vshrl.u32 %v522, 7
        %v524 = vsub.s32 0, %v523
        %v525 = vrot.slane %v225, %v524
        %v526 = vlaneseq
        %v527 = vshrl.u32 %v526, 7
        %v528 = vsub.s32 0, %v527
        %v529 = vrot.slane %v227, %v528
        %v530 = vlaneseq
        %v531 = vshrl.u32 %v530, 7
        %v532 = vsub.s32 0, %v531
        %v533 = vrot.slane %v229, %v532
        %v534 = vmul.f32 %v521, %v246
        %v535 = vmul.f32 %v521, %v247
        %v536 = vmul.f32 %v525, %v246
        %v537 = vmul.f32 %v525, %v247
        %v538 = vmul.f32 %v529, %v246
        %v539 = vmul.f32 %v529, %v247
        %v540 = vmul.f32 %v533, %v246
        %v541 = vmul.f32 %v533, %v247
        %v542 = vadd.f32 %v510, %v534
        %v543 = vadd.f32 %v511, %v535
        %v544 = vadd.f32 %v512, %v536
        %v545 = vadd.f32 %v513, %v537
        %v546 = vadd.f32 %v514, %v538
        %v547 = vadd.f32 %v515, %v539
        %v548 = vadd.f32 %v516, %v540
        %v549 = vadd.f32 %v517, %v541
        %v550 = vlaneseq
        %v551 = vshrl.u32 %v550, 7
        %v552 = vsub.s32 1, %v551
        %v553 = vrot.slane %v223, %v552
        %v554 = vlaneseq
        %v555 = vshrl.u32 %v554, 7
        %v556 = vsub.s32 1, %v555
        %v557 = vrot.slane %v225, %v556
        %v558 = vlaneseq
        %v559 = vshrl.u32 %v558, 7
        %v560 = vsub.s32 1, %v559
        %v561 = vrot.slane %v227, %v560
        %v562 = vlaneseq
        %v563 = vshrl.u32 %v562, 7
        %v564 = vsub.s32 1, %v563
        %v565 = vrot.slane %v229, %v564
        %v566 = vmul.f32 %v553, %v248
        %v567 = vmul.f32 %v553, %v249
        %v568 = vmul.f32 %v557, %v248
        %v569 = vmul.f32 %v557, %v249
        %v570 = vmul.f32 %v561, %v248
        %v571 = vmul.f32 %v561, %v249
        %v572 = vmul.f32 %v565, %v248
        %v573 = vmul.f32 %v565, %v249
        %v574 = vadd.f32 %v542, %v566
        %v575 = vadd.f32 %v543, %v567
        %v576 = vadd.f32 %v544, %v568
        %v577 = vadd.f32 %v545, %v569
        %v578 = vadd.f32 %v546, %v570
        %v579 = vadd.f32 %v547, %v571
        %v580 = vadd.f32 %v548, %v572
        %v581 = vadd.f32 %v549, %v573
        %v582 = vlaneseq
        %v583 = vshrl.u32 %v582, 7
        %v584 = vsub.s32 2, %v583
        %v585 = vrot.slane %v223, %v584
        %v586 = vlaneseq
        %v587 = vshrl.u32 %v586, 7
        %v588 = vsub.s32 2, %v587
        %v589 = vrot.slane %v225, %v588
        %v590 = vlaneseq
        %v591 = vshrl.u32 %v590, 7
        %v592 = vsub.s32 2, %v591
        %v593 = vrot.slane %v227, %v592
        %v594 = vlaneseq
        %v595 = vshrl.u32 %v594, 7
        %v596 = vsub.s32 2, %v595
        %v597 = vrot.slane %v229, %v596
        %v598 = vmul.f32 %v585, %v250
        %v599 = vmul.f32 %v585, %v251
        %v600 = vmul.f32 %v589, %v250
        %v601 = vmul.f32 %v589, %v251
        %v602 = vmul.f32 %v593, %v250
        %v603 = vmul.f32 %v593, %v251
        %v604 = vmul.f32 %v597, %v250
        %v605 = vmul.f32 %v597, %v251
        %v606 = vadd.f32 %v574, %v598
        %v607 = vadd.f32 %v575, %v599
        %v608 = vadd.f32 %v576, %v600
        %v609 = vadd.f32 %v577, %v601
        %v610 = vadd.f32 %v578, %v602
        %v611 = vadd.f32 %v579, %v603
        %v612 = vadd.f32 %v580, %v604
        %v613 = vadd.f32 %v581, %v605
        %v614 = vlaneseq
        %v615 = vshrl.u32 %v614, 7
        %v616 = vsub.s32 3, %v615
        %v617 = vrot.slane %v223, %v616
        %v618 = vlaneseq
        %v619 = vshrl.u32 %v618, 7
        %v620 = vsub.s32 3, %v619
        %v621 = vrot.slane %v225, %v620
        %v622 = vlaneseq
        %v623 = vshrl.u32 %v622, 7
        %v624 = vsub.s32 3, %v623
        %v625 = vrot.slane %v227, %v624
        %v626 = vlaneseq
        %v627 = vshrl.u32 %v626, 7
        %v628 = vsub.s32 3, %v627
        %v629 = vrot.slane %v229, %v628
        %v630 = vmul.f32 %v617, %v252
        %v631 = vmul.f32 %v617, %v253
        %v632 = vmul.f32 %v621, %v252
        %v633 = vmul.f32 %v621, %v253
        %v634 = vmul.f32 %v625, %v252
        %v635 = vmul.f32 %v625, %v253
        %v636 = vmul.f32 %v629, %v252
        %v637 = vmul.f32 %v629, %v253
        %v638 = vadd.f32 %v606, %v630
        %v639 = vadd.f32 %v607, %v631
        %v640 = vadd.f32 %v608, %v632
        %v641 = vadd.f32 %v609, %v633
        %v642 = vadd.f32 %v610, %v634
        %v643 = vadd.f32 %v611, %v635
        %v644 = vadd.f32 %v612, %v636
        %v645 = vadd.f32 %v613, %v637
        %v646 = vlaneseq
        %v647 = vshrl.u32 %v646, 7
        %v648 = vsub.s32 4, %v647
        %v649 = vrot.slane %v223, %v648
        %v650 = vlaneseq
        %v651 = vshrl.u32 %v650, 7
        %v652 = vsub.s32 4, %v651
        %v653 = vrot.slane %v225, %v652
        %v654 = vlaneseq
        %v655 = vshrl.u32 %v654, 7
        %v656 = vsub.s32 4, %v655
        %v657 = vrot.slane %v227, %v656
        %v658 = vlaneseq
        %v659 = vshrl.u32 %v658, 7
        %v660 = vsub.s32 4, %v659
        %v661 = vrot.slane %v229, %v660
        %v662 = vmul.f32 %v649, %v254
        %v663 = vmul.f32 %v649, %v255
        %v664 = vmul.f32 %v653, %v254
        %v665 = vmul.f32 %v653, %v255
        %v666 = vmul.f32 %v657, %v254
        %v667 = vmul.f32 %v657, %v255
        %v668 = vmul.f32 %v661, %v254
        %v669 = vmul.f32 %v661, %v255
        %v670 = vadd.f32 %v638, %v662
        %v671 = vadd.f32 %v639, %v663
        %v672 = vadd.f32 %v640, %v664
        %v673 = vadd.f32 %v641, %v665
        %v674 = vadd.f32 %v642, %v666
        %v675 = vadd.f32 %v643, %v667
        %v676 = vadd.f32 %v644, %v668
        %v677 = vadd.f32 %v645, %v669
        %v678 = vlaneseq
        %v679 = vshrl.u32 %v678, 7
        %v680 = vsub.s32 5, %v679
        %v681 = vrot.slane %v223, %v680
        %v682 = vlaneseq
        %v683 = vshrl.u32 %v682, 7
        %v684 = vsub.s32 5, %v683
        %v685 = vrot.slane %v225, %v684
        %v686 = vlaneseq
        %v687 = vshrl.u32 %v686, 7
        %v688 = vsub.s32 5, %v687
        %v689 = vrot.slane %v227, %v688
        %v690 = vlaneseq
        %v691 = vshrl.u32 %v690, 7
        %v692 = vsub.s32 5, %v691
        %v693 = vrot.slane %v229, %v692
        %v694 = vmul.f32 %v681, %v256
        %v695 = vmul.f32 %v681, %v257
        %v696 = vmul.f32 %v685, %v256
        %v697 = vmul.f32 %v685, %v257
        %v698 = vmul.f32 %v689, %v256
        %v699 = vmul.f32 %v689, %v257
        %v700 = vmul.f32 %v693, %v256
        %v701 = vmul.f32 %v693, %v257
        %v702 = vadd.f32 %v670, %v694
        %v703 = vadd.f32 %v671, %v695
        %v704 = vadd.f32 %v672, %v696
        %v705 = vadd.f32 %v673, %v697
        %v706 = vadd.f32 %v674, %v698
        %v707 = vadd.f32 %v675, %v699
        %v708 = vadd.f32 %v676, %v700
        %v709 = vadd.f32 %v677, %v701
        %v710 = vlaneseq
        %v711 = vshrl.u32 %v710, 7
        %v712 = vsub.s32 6, %v711
        %v713 = vrot.slane %v223, %v712
        %v714 = vlaneseq
        %v715 = vshrl.u32 %v714, 7
        %v716 = vsub.s32 6, %v715
        %v717 = vrot.slane %v225, %v716
        %v718 = vlaneseq
        %v719 = vshrl.u32 %v718, 7
        %v720 = vsub.s32 6, %v719
        %v721 = vrot.slane %v227, %v720
        %v722 = vlaneseq
        %v723 = vshrl.u32 %v722, 7
        %v724 = vsub.s32 6, %v723
        %v725 = vrot.slane %v229, %v724
        %v726 = vmul.f32 %v713, %v258
        %v727 = vmul.f32 %v713, %v259
        %v728 = vmul.f32 %v717, %v258
        %v729 = vmul.f32 %v717, %v259
        %v730 = vmul.f32 %v721, %v258
        %v731 = vmul.f32 %v721, %v259
        %v732 = vmul.f32 %v725, %v258
        %v733 = vmul.f32 %v725, %v259
        %v734 = vadd.f32 %v702, %v726
        %v735 = vadd.f32 %v703, %v727
        %v736 = vadd.f32 %v704, %v728
        %v737 = vadd.f32 %v705, %v729
        %v738 = vadd.f32 %v706, %v730
        %v739 = vadd.f32 %v707, %v731
        %v740 = vadd.f32 %v708, %v732
        %v741 = vadd.f32 %v709, %v733
        %v742 = vlaneseq
        %v743 = vshrl.u32 %v742, 7
        %v744 = vsub.s32 7, %v743
        %v745 = vrot.slane %v223, %v744
        %v746 = vlaneseq
        %v747 = vshrl.u32 %v746, 7
        %v748 = vsub.s32 7, %v747
        %v749 = vrot.slane %v225, %v748
        %v750 = vlaneseq
        %v751 = vshrl.u32 %v750, 7
        %v752 = vsub.s32 7, %v751
        %v753 = vrot.slane %v227, %v752
        %v754 = vlaneseq
        %v755 = vshrl.u32 %v754, 7
        %v756 = vsub.s32 7, %v755
        %v757 = vrot.slane %v229, %v756
        %v758 = vmul.f32 %v745, %v260
        %v759 = vmul.f32 %v745, %v261
        %v760 = vmul.f32 %v749, %v260
        %v761 = vmul.f32 %v749, %v261
        %v762 = vmul.f32 %v753, %v260
        %v763 = vmul.f32 %v753, %v261
        %v764 = vmul.f32 %v757, %v260
        %v765 = vmul.f32 %v757, %v261
        %v766 = vadd.f32 %v734, %v758
        %v767 = vadd.f32 %v735, %v759
        %v768 = vadd.f32 %v736, %v760
        %v769 = vadd.f32 %v737, %v761
        %v770 = vadd.f32 %v738, %v762
        %v771 = vadd.f32 %v739, %v763
        %v772 = vadd.f32 %v740, %v764
        %v773 = vadd.f32 %v741, %v765
        %774 = vst [vmem:[%s221] sm:$0xff] %v766
        %775 = vst [vmem:[%s221 + $0x8] sm:$0xff] %v767
        %776 = vst [vmem:[%s221 + $0x10] sm:$0xff] %v768
        %777 = vst [vmem:[%s221 + $0x18] sm:$0xff] %v769
        %778 = vst [vmem:[%s221 + $0x20] sm:$0xff] %v770
        %779 = vst [vmem:[%s221 + $0x28] sm:$0xff] %v771
        %780 = vst [vmem:[%s221 + $0x30] sm:$0xff] %v772
        %781 = vst [vmem:[%s221 + $0x38] sm:$0xff] %v773
        %s782 = sand.u32 %s100, 1
        %s783 = scalar_lea.sflag [#allocation4], %s782
        %s784 = sand.u32 %s100, 1
        %s785 = smul.addr %s784, 64
        %s786 = scalar_lea.vmem [#allocation7], %s785
        // Predicated region
        $region37: #{tpu_custom_call.1} parent=27 // pred_check
          %p787 = pneg %p110
        $region38: #{tpu_custom_call.1} parent=27 // pred_check_branch
          %789 = sbr.rel (%p787) target = $region40
        $region39: #{tpu_custom_call.1} parent=27 // pred_region
          %s791 = ssub.s32 1024, 1024
          %792 = vsyncadd %s783, %s791
          %s793 = smul.addr %s26, 8
          %s794 = sadd.s32 %s27, %s793
          %s795 = smul.addr %s794, 128
          %s796 = scalar_lea.hbm %s2, %s795
          %s797 = sshll.u32 %s786, 4
          %s798 = int_to_ptr.vmem [resolvable:$true] %s797
          %803 = dma.vmem_to_hbm [thread:$0]  %s798, 1024, %s796, %s783, 128, 128, 8
        $region40: #{tpu_custom_call.1} parent=27 // pred_fallthru
          _
      $region28: #{tpu_custom_call.1} parent=5 // pred_fallthru
        _
      %p804 = scmp.le.s32.totalorder 2, %s17
      // Predicated region
      $region41: #{tpu_custom_call.1} parent=5 // pred_check
        %p805 = pneg %p804
      $region42: #{tpu_custom_call.1} parent=5 // pred_check_branch
        %807 = sbr.rel (%p805) target = $region44
      $region43: #{tpu_custom_call.1} parent=5 // pred_region
        %s808 = ssub.s32 %s17, 2
        // Predicated region
        $region45: #{tpu_custom_call.1} parent=43 // pred_check
          %p809 = pneg %p116
        $region46: #{tpu_custom_call.1} parent=43 // pred_check_branch
          %811 = sbr.rel (%p809) target = $region48
        $region47: #{tpu_custom_call.1} parent=43 // pred_region
          %s812 = sand.u32 %s101, 1
          %s813 = scalar_lea.sflag [#allocation4], %s812
          %s814 = sand.u32 %s101, 1
          %s815 = smul.addr %s814, 64
          %s816 = scalar_lea.vmem [#allocation7], %s815
          %817 = dma.done %s813, 1024
        $region48: #{tpu_custom_call.1} parent=43 // pred_fallthru
          _
      $region44: #{tpu_custom_call.1} parent=5 // pred_fallthru
        _
    $region6: #{tpu_custom_call.1} parent=1 // loop_footer
      %s21 = sadd.s32 1, %s17
    $region7: #{tpu_custom_call.1} parent=1 // loop_footer_branch
      %16 = sbr.rel target = $region3
    $region8: #{tpu_custom_call.1} parent=1 // loop_exit
      _
    %818 = vsyncpa [#allocation3], 1
    %s819 = scalar_lea.sflag [#allocation3], 1
    %820 = vsyncpa %s819, 1
    %821 = vsyncpa [#allocation6], 1
    %s822 = scalar_lea.sflag [#allocation6], 1
    %823 = vsyncpa %s822, 1
    %824 = vsyncpa [#allocation4], 1
    %s825 = scalar_lea.sflag [#allocation4], 1
    %826 = vsyncpa %s825, 1

</llo_original>
